<compile_context>
chip_gen: v5e
topology: v5e:2x2
jax: 0.10.0
libtpu: 0.0.40
codegen_flags: <defaults>
</compile_context>

<pallas_src>
import functools

import jax
import jax.numpy as jnp
from jax import lax
from jax.experimental import pallas as pl
from jax.experimental.pallas import tpu as pltpu


_NEG_INF = float(-1e30)  # finite "-inf": masked lanes never produce inf-inf NaNs


def _vmem_capacity_bytes(default=64 * 2**20):
    """Per-core VMEM capacity; conservative 64 MiB (v7x) fallback."""
    try:
        info = pltpu.get_tpu_info()
        cap = int(getattr(info, "vmem_capacity_bytes", 0) or 0)
        if cap > 0:
            return cap
    except Exception:
        pass
    return default


def _choose_tile_hw(hw, c, itemsize, tile_budget_bytes):
    """Largest lane-aligned HW tile whose (C, tile) block fits tile_budget_bytes."""
    if hw <= 128:
        return int(hw)                       # full dim -> exempt from 128 rule
    t = (tile_budget_bytes // max(1, c * itemsize)) // 128 * 128
    t = max(128, min(t, (hw // 128) * 128))  # never exceed the array extent
    return int(t)


# ---------------------------------------------------------------------------
# Kernel 1: single-pass fused DPM (whole (C, HW) slab resident per batch item)
# ---------------------------------------------------------------------------
def _dpm_fused_kernel(x_ref, wm_ref, w1_ref, w2_ref, o_ref, *, leak):
    x = x_ref[0]                                    # (C, HW), input dtype
    wm = wm_ref[...]                                # (C, 1), f32 (pre-cast)

    # conv_mask logits: sum_c wm[c] * x[c, :]   (VPU mul + sublane reduce)
    s = jnp.sum((x * wm).astype(jnp.float32), axis=0, keepdims=True)   # (1, HW)
    m = jnp.max(s, axis=-1, keepdims=True)
    p = jnp.exp(s - m)                              # (1, HW)
    l = jnp.sum(p, axis=-1, keepdims=True)          # (1, 1)

    # context: contract HW directly (no (C, HW) f32 temporary)
    ctx = lax.dot_general(
        x, p.astype(x.dtype),
        dimension_numbers=(((1,), (1,)), ((), ())),
        preferred_element_type=jnp.float32) / l     # (C, 1)

    # channel_add_conv: 1x1 conv -> LeakyReLU(0.2) -> 1x1 conv
    h = jnp.dot(w1_ref[...], ctx, preferred_element_type=jnp.float32)  # (P, 1)
    h = jnp.where(h >= 0, h, leak * h)
    add = jnp.dot(w2_ref[...], h, preferred_element_type=jnp.float32)  # (C, 1)

    o_ref[0] = (x + add.astype(x.dtype)).astype(o_ref.dtype)


# ---------------------------------------------------------------------------
# Kernel 2 (tiled path, pass 1): online-softmax spatial pooling, per-(b, split)
# partials (running max m, exp-sum l, un-normalized context ctx).
# ---------------------------------------------------------------------------
def _dpm_pool_partial_kernel(x_ref, wm_ref, m_ref, l_ref, ctx_ref,
                             m_sc, l_sc, ctx_sc, *,
                             hw, tile_hw, t_per_s, needs_mask):
    t = pl.program_id(2)

    @pl.when(t == 0)
    def _init():
        m_sc[...] = jnp.full_like(m_sc, _NEG_INF)
        l_sc[...] = jnp.zeros_like(l_sc)
        ctx_sc[...] = jnp.zeros_like(ctx_sc)

    x = x_ref[0]                                    # (C, THW), input dtype
    wm = wm_ref[...]                                # (C, 1), f32

    if needs_mask:
        # Global (un-clamped) tile index handles both the partial HW tail and
        # "ghost" tiles of an uneven HW split: their lanes are all invalid.
        g = pl.program_id(1) * t_per_s + t
        col = g * tile_hw + lax.broadcasted_iota(jnp.int32, (1, tile_hw), 1)
        valid = col < hw
        # zero padded lanes so stale VMEM (even NaN bit patterns) cannot leak
        # into the context reduce below.
        x = jnp.where(valid, x, jnp.zeros_like(x))

    s = jnp.sum((x * wm).astype(jnp.float32), axis=0, keepdims=True)   # (1, THW)
    if needs_mask:
        s = jnp.where(valid, s, _NEG_INF)

    # ---- online softmax update across HW tiles ----
    m_prev = m_sc[...]
    m_new = jnp.maximum(m_prev, jnp.max(s, axis=-1, keepdims=True))
    alpha = jnp.exp(m_prev - m_new)
    p = jnp.exp(s - m_new)                                             # masked -> 0
    l_sc[...] = alpha * l_sc[...] + jnp.sum(p, axis=-1, keepdims=True)

    # context partial: fused VPU mul + lane reduce (no MXU operand copy)
    ctx_part = jnp.sum(x.astype(jnp.float32) * p, axis=1, keepdims=True)  # (C, 1)
    ctx_sc[...] = alpha * ctx_sc[...] + ctx_part
    m_sc[...] = m_new

    @pl.when(t == pl.num_programs(2) - 1)
    def _finalize():
        m_ref[0, 0] = m_sc[...]
        l_ref[0, 0] = l_sc[...]
        ctx_ref[0, 0] = ctx_sc[...]


# ---------------------------------------------------------------------------
# Kernel 3 (tiled path, pass 2): broadcast the per-batch channel-add over HW.
# ---------------------------------------------------------------------------
def _dpm_add_kernel(x_ref, add_ref, o_ref):
    add = add_ref[0].astype(o_ref.dtype)                 # (C, 1)
    o_ref[0] = x_ref[0].astype(o_ref.dtype) + add        # (C, THW) lane-dense store


# ---------------------------------------------------------------------------
# Wrapper
# ---------------------------------------------------------------------------
def dpm_forward(x_nchw, w_mask, w1, w2, *, leak=0.2, mode="auto",
                tile_hw_pool=None, tile_hw_add=None, hw_splits=None,
                add_mode="pallas"):
    """DPM forward. x: (B,C,H,W). w_mask: (1,C). w1: (P,C). w2: (C,P)."""
    assert mode in ("auto", "fused", "tiled")
    assert add_mode in ("pallas", "xla")
    B, C, H, W = x_nchw.shape
    HW = H * W
    P = w1.shape[0]
    itemsize = jnp.dtype(x_nchw.dtype).itemsize

    x_flat = x_nchw.reshape(B, C, HW)
    # Hoist weight casts out of the hot path.
    wm_col = jnp.asarray(w_mask, jnp.float32).reshape(C, 1)
    w1_f = jnp.asarray(w1, jnp.float32)
    w2_f = jnp.asarray(w2, jnp.float32)

    vmem_cap = _vmem_capacity_bytes()
    budget = (vmem_cap * 3) // 4                       # working-set budget
    vmem_limit = int(min(vmem_cap, budget + (8 << 20)))
    slab_bytes = C * HW * itemsize

    use_fused = (mode == "fused") or (
        mode == "auto" and 6 * slab_bytes + (1 << 20) <= budget)

    if use_fused:
        out_flat = pl.pallas_call(
            functools.partial(_dpm_fused_kernel, leak=leak),
            out_shape=jax.ShapeDtypeStruct((B, C, HW), x_nchw.dtype),
            grid_spec=pltpu.PrefetchScalarGridSpec(
                num_scalar_prefetch=0,
                grid=(B,),
                in_specs=[
                    pl.BlockSpec((1, C, HW), lambda b: (b, 0, 0)),
                    pl.BlockSpec((C, 1), lambda b: (0, 0)),
                    pl.BlockSpec((P, C), lambda b: (0, 0)),
                    pl.BlockSpec((C, P), lambda b: (0, 0)),
                ],
                out_specs=pl.BlockSpec((1, C, HW), lambda b: (b, 0, 0)),
            ),
            compiler_params=pltpu.CompilerParams(
                dimension_semantics=("parallel",),
                vmem_limit_bytes=vmem_limit),
        )(x_flat, wm_col, w1_f, w2_f)
        return out_flat.reshape(B, C, H, W)

    # ---------------- tiled two-pass fallback (large feature maps) ----------
    if tile_hw_pool is None:
        # pass 1 streams only x; size as if f32 (covers in-kernel f32 temps)
        tile_hw_pool = _choose_tile_hw(HW, C, max(itemsize, 4), budget // 5)
    if tile_hw_add is None:
        # pass 2 double-buffers in + out blocks
        tile_hw_add = _choose_tile_hw(HW, C, itemsize, budget // 6)

    n_t = int(pl.cdiv(HW, tile_hw_pool))
    if hw_splits is None:
        hw_splits = 2 if (B == 1 and n_t >= 2) else 1   # megacore-friendly at B=1
    S = int(max(1, min(hw_splits, n_t)))
    t_per_s = int(pl.cdiv(n_t, S))
    needs_mask = (HW % tile_hw_pool != 0) or (S * t_per_s != n_t)

    # clamp ghost tiles into range; their lanes are masked out in-kernel
    x_map = lambda b, s, t: (b, 0, jnp.minimum(s * t_per_s + t, n_t - 1))

    m_p, l_p, ctx_p = pl.pallas_call(
        functools.partial(_dpm_pool_partial_kernel, hw=HW, tile_hw=tile_hw_pool,
                          t_per_s=t_per_s, needs_mask=needs_mask),
        out_shape=(jax.ShapeDtypeStruct((B, S, 1, 1), jnp.float32),
                   jax.ShapeDtypeStruct((B, S, 1, 1), jnp.float32),
                   jax.ShapeDtypeStruct((B, S, C, 1), jnp.float32)),
        grid_spec=pltpu.PrefetchScalarGridSpec(
            num_scalar_prefetch=0,
            grid=(B, S, t_per_s),
            in_specs=[
                pl.BlockSpec((1, C, tile_hw_pool), x_map),
                pl.BlockSpec((C, 1), lambda b, s, t: (0, 0)),
            ],
            out_specs=[
                pl.BlockSpec((1, 1, 1, 1), lambda b, s, t: (b, s, 0, 0)),
                pl.BlockSpec((1, 1, 1, 1), lambda b, s, t: (b, s, 0, 0)),
                pl.BlockSpec((1, 1, C, 1), lambda b, s, t: (b, s, 0, 0)),
            ],
            scratch_shapes=[
                pltpu.VMEM((1, 1), jnp.float32),   # running max
                pltpu.VMEM((1, 1), jnp.float32),   # running exp-sum
                pltpu.VMEM((C, 1), jnp.float32),   # running un-normalized context
            ],
        ),
        compiler_params=pltpu.CompilerParams(
            dimension_semantics=("parallel", "parallel", "arbitrary"),
            vmem_limit_bytes=vmem_limit),
    )(x_flat, wm_col)

    # LSE-correct merge of the per-(batch, split) partials + tiny channel MLP
    # (O(B*C*P) work) in plain XLA.
    m_glob = jnp.max(m_p, axis=1, keepdims=True)               # (B,1,1,1)
    wgt = jnp.exp(m_p - m_glob)                                # (B,S,1,1)
    l_glob = jnp.sum(wgt * l_p, axis=1)                        # (B,1,1)
    ctx_glob = jnp.sum(wgt * ctx_p, axis=1)                    # (B,C,1)
    context = (ctx_glob / l_glob)[..., 0]                      # (B,C)
    h = context @ w1_f.T
    h = jnp.where(h >= 0, h, leak * h)                         # LeakyReLU(0.2)
    add = h @ w2_f.T                                           # (B,C)
    add_col = add[:, :, None].astype(jnp.float32)              # (B,C,1)

    if add_mode == "xla":
        # let XLA fuse the broadcast add with downstream consumers
        out_flat = x_flat + add_col.astype(x_flat.dtype)
        return out_flat.reshape(B, C, H, W)

    n_t2 = int(pl.cdiv(HW, tile_hw_add))
    out_flat = pl.pallas_call(
        _dpm_add_kernel,
        out_shape=jax.ShapeDtypeStruct((B, C, HW), x_nchw.dtype),
        grid_spec=pltpu.PrefetchScalarGridSpec(
            num_scalar_prefetch=0,
            grid=(B, n_t2),
            in_specs=[
                pl.BlockSpec((1, C, tile_hw_add), lambda b, t: (b, 0, t)),
                pl.BlockSpec((1, C, 1), lambda b, t: (b, 0, 0)),
            ],
            out_specs=pl.BlockSpec((1, C, tile_hw_add), lambda b, t: (b, 0, t)),
        ),
        compiler_params=pltpu.CompilerParams(
            dimension_semantics=("parallel", "parallel"),
            vmem_limit_bytes=vmem_limit),
    )(x_flat, add_col)
    return out_flat.reshape(B, C, H, W)


def dpm_reference(x_nchw, w_mask, w1, w2):
    """Pure-JAX reference mirroring the PyTorch DPM.forward."""
    B, C, H, W = x_nchw.shape
    x = x_nchw.reshape(B, C, H * W)                       # (B, C, HW)
    logits = jnp.einsum('oc,bch->boh', w_mask, x)         # (B, 1, HW)
    attn = jax.nn.softmax(logits, axis=2)                 # softmax over HW
    context = jnp.einsum('bch,boh->bc', x, attn)          # (B, C)
    h = jnp.einsum('pc,bc->bp', w1, context)
    h = jnp.where(h >= 0, h, 0.2 * h)
    add = jnp.einsum('cp,bp->bc', w2, h)                  # (B, C)
    return x_nchw + add[:, :, None, None]


if __name__ == "__main__":
    key = jax.random.PRNGKey(0)
    kx1, kx2, km, k1, k2 = jax.random.split(key, 5)

    C, planes = 32, 32   # matches DPM(32, 32) as instantiated inside AE
    # conv_mask:            Conv2d(C, 1, k=1, bias=False)     -> weight (1, C)
    w_mask = jax.random.normal(km, (1, C), dtype=jnp.float32) * 0.1
    # channel_add_conv[0]:  Conv2d(C, P, k=1, bias=False)     -> (P, C)
    w1 = jax.random.normal(k1, (planes, C), dtype=jnp.float32) * 0.1
    # channel_add_conv[2]:  Conv2d(P, C, k=1, bias=False)     -> (C, P)
    w2 = jax.random.normal(k2, (C, planes), dtype=jnp.float32) * 0.1

    # case 1: small feature map -> single-pass fused kernel (auto-selected)
    x1 = jax.random.normal(kx1, (2, C, 16, 16), dtype=jnp.float32)
    ref1 = dpm_reference(x1, w_mask, w1, w2)
    out1 = jax.block_until_ready(dpm_forward(x1, w_mask, w1, w2))
    assert out1.shape == x1.shape
    assert jnp.allclose(out1, ref1, atol=1e-4, rtol=1e-4)

    # case 2: forced tiled two-pass path; HW=320 (non-128-aligned tail) and
    # B=1 so the HW axis is auto-split into 2 "parallel" sub-ranges
    # (megacore-friendly on v7x), exercising ghost tiles + the LSE merge.
    x2 = jax.random.normal(kx2, (1, C, 16, 20), dtype=jnp.float32)
    ref2 = dpm_reference(x2, w_mask, w1, w2)
    out2 = jax.block_until_ready(
        dpm_forward(x2, w_mask, w1, w2, mode="tiled",
                    tile_hw_pool=128, tile_hw_add=128))
    assert jnp.allclose(out2, ref2, atol=1e-4, rtol=1e-4)

    # case 3: tiled path with the broadcast-add left to XLA (fusion-friendly)
    out3 = jax.block_until_ready(
        dpm_forward(x2, w_mask, w1, w2, mode="tiled",
                    tile_hw_pool=128, add_mode="xla"))
    assert jnp.allclose(out3, ref2, atol=1e-4, rtol=1e-4)

    print("KERNEL_OK")
</pallas_src>

<mosaic_0001>
module attributes {stable_mosaic.version = 11 : i64} {
  func.func @_dpm_fused_kernel(%arg0: i32, %arg1: memref<1x32x256xf32, #tpu.memory_space<vmem>>, %arg2: memref<32x1xf32, #tpu.memory_space<vmem>>, %arg3: memref<32x32xf32, #tpu.memory_space<vmem>>, %arg4: memref<32x32xf32, #tpu.memory_space<vmem>>, %arg5: memref<1x32x256xf32, #tpu.memory_space<vmem>>) attributes {dimension_semantics = [#tpu.dimension_semantics<parallel>], iteration_bounds = array<i64: 2>, scalar_prefetch = 0 : i64, scratch_operands = 0 : i64, tpu.core_type = #tpu.core_type<tc>, window_params = [{transform_indices = @transform_0, window_bounds = array<i64: 1, 32, 256>}, {pipeline_mode = #tpu.pipeline_mode<synchronous>, transform_indices = @transform_1, window_bounds = array<i64: 32, 1>}, {pipeline_mode = #tpu.pipeline_mode<synchronous>, transform_indices = @transform_2, window_bounds = array<i64: 32, 32>}, {pipeline_mode = #tpu.pipeline_mode<synchronous>, transform_indices = @transform_3, window_bounds = array<i64: 32, 32>}, {transform_indices = @transform_4, window_bounds = array<i64: 1, 32, 256>}]} {
    %c0 = arith.constant 0 : index
    %c0_0 = arith.constant 0 : index
    %c0_1 = arith.constant 0 : index
    %0 = vector.load %arg1[%c0, %c0_0, %c0_1] : memref<1x32x256xf32, #tpu.memory_space<vmem>>, vector<1x32x256xf32>
    %1 = vector.shape_cast %0 : vector<1x32x256xf32> to vector<32x256xf32>
    %c0_2 = arith.constant 0 : index
    %c0_3 = arith.constant 0 : index
    %2 = vector.load %arg2[%c0_2, %c0_3] : memref<32x1xf32, #tpu.memory_space<vmem>>, vector<32x1xf32>
    %3 = vector.broadcast %2 : vector<32x1xf32> to vector<32x256xf32>
    %4 = arith.mulf %1, %3 : vector<32x256xf32>
    %cst = arith.constant dense<0.000000e+00> : vector<256xf32>
    %5 = vector.multi_reduction <add>, %4, %cst [0] : vector<32x256xf32> to vector<256xf32>
    %6 = vector.shape_cast %5 : vector<256xf32> to vector<1x256xf32>
    %cst_4 = arith.constant dense<0xFF800000> : vector<1xf32>
    %7 = vector.multi_reduction <maximumf>, %6, %cst_4 [1] : vector<1x256xf32> to vector<1xf32>
    %8 = vector.shape_cast %7 : vector<1xf32> to vector<1x1xf32>
    %9 = vector.broadcast %8 : vector<1x1xf32> to vector<1x256xf32>
    %10 = arith.subf %6, %9 : vector<1x256xf32>
    %11 = math.exp %10 : vector<1x256xf32>
    %cst_5 = arith.constant dense<0.000000e+00> : vector<1xf32>
    %12 = vector.multi_reduction <add>, %11, %cst_5 [1] : vector<1x256xf32> to vector<1xf32>
    %13 = vector.shape_cast %12 : vector<1xf32> to vector<1x1xf32>
    %cst_6 = arith.constant dense<0.000000e+00> : vector<32x1xf32>
    %14 = tpu.matmul %1, %11, %cst_6 {dimension_numbers = #tpu.dot_dimension_numbers<[1], [1], [0], [0], [0, 0, 1, 0], [], []>} : vector<32x256xf32>, vector<1x256xf32>, vector<32x1xf32> -> vector<32x1xf32>
    %15 = vector.broadcast %13 : vector<1x1xf32> to vector<32x1xf32>
    %16 = arith.divf %14, %15 : vector<32x1xf32>
    %c0_7 = arith.constant 0 : index
    %c0_8 = arith.constant 0 : index
    %17 = vector.load %arg3[%c0_7, %c0_8] : memref<32x32xf32, #tpu.memory_space<vmem>>, vector<32x32xf32>
    %cst_9 = arith.constant dense<0.000000e+00> : vector<32x1xf32>
    %18 = tpu.matmul %17, %16, %cst_9 {dimension_numbers = #tpu.dot_dimension_numbers<[1], [0], [0], [1], [0, 0, 1, 1], [], []>} : vector<32x32xf32>, vector<32x1xf32>, vector<32x1xf32> -> vector<32x1xf32>
    %cst_10 = arith.constant 0.000000e+00 : f32
    %19 = vector.broadcast %cst_10 : f32 to vector<32x1xf32>
    %20 = arith.cmpf oge, %18, %19 : vector<32x1xf32>
    %cst_11 = arith.constant 2.000000e-01 : f32
    %21 = vector.broadcast %cst_11 : f32 to vector<32x1xf32>
    %22 = arith.mulf %21, %18 : vector<32x1xf32>
    %23 = arith.select %20, %18, %22 : vector<32x1xi1>, vector<32x1xf32>
    %c0_12 = arith.constant 0 : index
    %c0_13 = arith.constant 0 : index
    %24 = vector.load %arg4[%c0_12, %c0_13] : memref<32x32xf32, #tpu.memory_space<vmem>>, vector<32x32xf32>
    %cst_14 = arith.constant dense<0.000000e+00> : vector<32x1xf32>
    %25 = tpu.matmul %24, %23, %cst_14 {dimension_numbers = #tpu.dot_dimension_numbers<[1], [0], [0], [1], [0, 0, 1, 1], [], []>} : vector<32x32xf32>, vector<32x1xf32>, vector<32x1xf32> -> vector<32x1xf32>
    %26 = vector.broadcast %25 : vector<32x1xf32> to vector<32x256xf32>
    %27 = arith.addf %1, %26 : vector<32x256xf32>
    %c0_15 = arith.constant 0 : index
    %c0_16 = arith.constant 0 : index
    %c0_17 = arith.constant 0 : index
    %28 = vector.load %arg5[%c0_15, %c0_16, %c0_17] : memref<1x32x256xf32, #tpu.memory_space<vmem>>, vector<1x32x256xf32>
    %29 = vector.shape_cast %28 : vector<1x32x256xf32> to vector<32x256xf32>
    %30 = vector.shape_cast %27 : vector<32x256xf32> to vector<1x32x256xf32>
    tpu.vector_store %arg5[%c0_15, %c0_16, %c0_17], %30 {strides = array<i32>} : memref<1x32x256xf32, #tpu.memory_space<vmem>>, vector<1x32x256xf32>,
    return
  }
  func.func @transform_0(%arg0: i32) -> (i32, i32, i32) {
    %c0_i32 = arith.constant 0 : i32
    %c0_i32_0 = arith.constant 0 : i32
    %c0_i32_1 = arith.constant 0 : i32
    return %arg0, %c0_i32, %c0_i32_0 : i32, i32, i32
  }
  func.func @transform_1(%arg0: i32) -> (i32, i32) {
    %c0_i32 = arith.constant 0 : i32
    %c0_i32_0 = arith.constant 0 : i32
    %c0_i32_1 = arith.constant 0 : i32
    return %c0_i32, %c0_i32_0 : i32, i32
  }
  func.func @transform_2(%arg0: i32) -> (i32, i32) {
    %c0_i32 = arith.constant 0 : i32
    %c0_i32_0 = arith.constant 0 : i32
    %c0_i32_1 = arith.constant 0 : i32
    return %c0_i32, %c0_i32_0 : i32, i32
  }
  func.func @transform_3(%arg0: i32) -> (i32, i32) {
    %c0_i32 = arith.constant 0 : i32
    %c0_i32_0 = arith.constant 0 : i32
    %c0_i32_1 = arith.constant 0 : i32
    return %c0_i32, %c0_i32_0 : i32, i32
  }
  func.func @transform_4(%arg0: i32) -> (i32, i32, i32) {
    %c0_i32 = arith.constant 0 : i32
    %c0_i32_0 = arith.constant 0 : i32
    %c0_i32_1 = arith.constant 0 : i32
    return %arg0, %c0_i32, %c0_i32_0 : i32, i32, i32
  }
}

</mosaic_0001>

<llo_original>
// kernel: tpu_custom_call.1
$region0: #{tpu_custom_call.1}
  #allocation0 [shape = 'u32[]', space=smem, size = 0x4, offset = 0x4, fixed_abs, tag = 'smem constant byte address 0x4 - core index']
  #allocation1 [shape = 'u32[72,128]{1,0:T(1,128)}', space=vmem, size = 0x9000, scoped, tag = 'internal scratch']
  %s0 = inlined_call_operand.hbm [shape: f32[2,32,256], index: 0, kind: input, shape index: {}]
  %s1 = inlined_call_operand.vmem [shape: f32[32,1], index: 1, kind: input, shape index: {}]
  %s2 = inlined_call_operand.vmem [shape: f32[32,32], index: 2, kind: input, shape index: {}]
  %s3 = inlined_call_operand.hbm [shape: f32[32,32], index: 3, kind: input, shape index: {}]
  %s4 = inlined_call_operand.hbm [shape: f32[2,32,256], index: 4, kind: output, shape index: {}]
  %s5 = sld [smem:[#allocation0]]
  $region57: #{tpu_custom_call.1} parent=0
    _
  %s7 = ssub.s32 1, %s5
  %s8 = scalar_select 0, %s7, %s5
  $region1: #{tpu_custom_call.1} parent=0
    #allocation2 [shape = 'u8[65536]{0}', space=vmem, size = 0x10000, scoped, tag = 'input window, operand 0']
    #allocation3 [shape = 's32[2]{0}', space=sflag, size = 0x8, scoped, tag = 'scoped memory for tpu_custom_call.1']
    #allocation4 [shape = 's32[2]{0}', space=sflag, size = 0x8, scoped, tag = 'scoped memory for tpu_custom_call.1']
    #allocation5 [shape = 'u8[16384]{0}', space=vmem, size = 0x4000, scoped, tag = 'input window, operand 3, single buffered']
    #allocation6 [shape = 's32[1]{0}', space=sflag, size = 0x4, scoped, tag = 'scoped memory for tpu_custom_call.1']
    #allocation7 [shape = 'u8[65536]{0}', space=vmem, size = 0x10000, scoped, tag = 'output window, operand 0']
    %9 = vsyncpa [#allocation3], 0
    %s10 = scalar_lea.sflag [#allocation3], 1
    %11 = vsyncpa %s10, 0
    %12 = vsyncpa [#allocation6], 0
    %13 = vsyncpa [#allocation4], 0
    %s14 = scalar_lea.sflag [#allocation4], 1
    %15 = vsyncpa %s14, 0
    loop: start=0, step=1, limit=4
    $region2: #{tpu_custom_call.1} parent=1 // loop_pre_header
      _
    $region3: #{tpu_custom_call.1} parent=1 // loop_header
      %s17 = sphi 0, %s21
      %p18 = scmp.ge.s32.totalorder %s17, 4
      %s27 = sphi 0, %s29
      %s30 = sphi 0, %s27
      %s31 = sphi 0, %s30
      %s47 = sphi 0, %s31
      %s51 = sphi 0, %s51
      %s53 = sphi 0, %s51
      %s54 = sphi 0, %s53
      %s68 = sphi 0, %s54
      %s72 = sphi 0, %s72
      %s74 = sphi 0, %s72
      %s75 = sphi 0, %s74
      %s89 = sphi 0, %s75
      %s93 = sphi 0, %s93
      %s95 = sphi 0, %s93
      %s96 = sphi 0, %s95
      %s110 = sphi 0, %s96
      %s116 = sphi 0, %s118
      %s119 = sphi 0, %s116
      %s120 = sphi 0, %s119
      %s136 = sphi 0, %s120
    $region4: #{tpu_custom_call.1} parent=1 // loop_header_branch
      %20 = sbr.rel (%p18) target = $region8
    $region5: #{tpu_custom_call.1} parent=1 // loop_body
      %s22 = ssub.s32 %s17, 1
      %s23 = ssub.s32 %s17, 2
      %s24 = sadd.s32 %s17, 1
      %s25 = ssub.s32 %s17, %s24
      %p26 = scmp.eq.s32.totalorder %s25, 0
      %s28 = sadd.s32 %s27, 1
      %s29 = scalar_select %p26, %s27, %s28
      %p32 = pneg %p26
      %p33 = scmp.eq.s32.totalorder %s17, 1
      %p34 = por %p32, %p33
      %p35 = scmp.ne.s32.totalorder %s27, %s30
      %p36 = scmp.eq.s32.totalorder %s17, 0
      %p37 = por %p35, %p36
      %p38 = scmp.ne.s32.totalorder %s27, %s30
      %p39 = scmp.eq.s32.totalorder %s22, 1
      %p40 = por %p38, %p39
      %p41 = scmp.ne.s32.totalorder %s30, %s31
      %p42 = scmp.eq.s32.totalorder %s22, 0
      %p43 = por %p41, %p42
      %p44 = scmp.ne.s32.totalorder %s30, %s31
      %p45 = scmp.eq.s32.totalorder %s23, 1
      %p46 = por %p44, %p45
      %p48 = scmp.ne.s32.totalorder %s31, %s47
      %p49 = scmp.eq.s32.totalorder %s23, 0
      %p50 = por %p48, %p49
      %s52 = sadd.s32 %s51, 1
      %p55 = scmp.eq.s32.totalorder %s17, 1
      %p56 = scmp.ne.s32.totalorder %s51, %s53
      %p57 = scmp.eq.s32.totalorder %s17, 0
      %p58 = por %p56, %p57
      %p59 = scmp.ne.s32.totalorder %s51, %s53
      %p60 = scmp.eq.s32.totalorder %s22, 1
      %p61 = por %p59, %p60
      %p62 = scmp.ne.s32.totalorder %s53, %s54
      %p63 = scmp.eq.s32.totalorder %s22, 0
      %p64 = por %p62, %p63
      %p65 = scmp.ne.s32.totalorder %s53, %s54
      %p66 = scmp.eq.s32.totalorder %s23, 1
      %p67 = por %p65, %p66
      %p69 = scmp.ne.s32.totalorder %s54, %s68
      %p70 = scmp.eq.s32.totalorder %s23, 0
      %p71 = por %p69, %p70
      %s73 = sadd.s32 %s72, 1
      %p76 = scmp.eq.s32.totalorder %s17, 1
      %p77 = scmp.ne.s32.totalorder %s72, %s74
      %p78 = scmp.eq.s32.totalorder %s17, 0
      %p79 = por %p77, %p78
      %p80 = scmp.ne.s32.totalorder %s72, %s74
      %p81 = scmp.eq.s32.totalorder %s22, 1
      %p82 = por %p80, %p81
      %p83 = scmp.ne.s32.totalorder %s74, %s75
      %p84 = scmp.eq.s32.totalorder %s22, 0
      %p85 = por %p83, %p84
      %p86 = scmp.ne.s32.totalorder %s74, %s75
      %p87 = scmp.eq.s32.totalorder %s23, 1
      %p88 = por %p86, %p87
      %p90 = scmp.ne.s32.totalorder %s75, %s89
      %p91 = scmp.eq.s32.totalorder %s23, 0
      %p92 = por %p90, %p91
      %s94 = sadd.s32 %s93, 1
      %p97 = scmp.eq.s32.totalorder %s17, 1
      %p98 = scmp.ne.s32.totalorder %s93, %s95
      %p99 = scmp.eq.s32.totalorder %s17, 0
      %p100 = por %p98, %p99
      %p101 = scmp.ne.s32.totalorder %s93, %s95
      %p102 = scmp.eq.s32.totalorder %s22, 1
      %p103 = por %p101, %p102
      %p104 = scmp.ne.s32.totalorder %s95, %s96
      %p105 = scmp.eq.s32.totalorder %s22, 0
      %p106 = por %p104, %p105
      %p107 = scmp.ne.s32.totalorder %s95, %s96
      %p108 = scmp.eq.s32.totalorder %s23, 1
      %p109 = por %p107, %p108
      %p111 = scmp.ne.s32.totalorder %s96, %s110
      %p112 = scmp.eq.s32.totalorder %s23, 0
      %p113 = por %p111, %p112
      %s114 = ssub.s32 %s17, %s24
      %p115 = scmp.eq.s32.totalorder %s114, 0
      %s117 = sadd.s32 %s116, 1
      %s118 = scalar_select %p115, %s116, %s117
      %p121 = pneg %p115
      %p122 = scmp.eq.s32.totalorder %s17, 1
      %p123 = por %p121, %p122
      %p124 = scmp.ne.s32.totalorder %s116, %s119
      %p125 = scmp.eq.s32.totalorder %s17, 0
      %p126 = por %p124, %p125
      %p127 = scmp.ne.s32.totalorder %s116, %s119
      %p128 = scmp.eq.s32.totalorder %s22, 1
      %p129 = por %p127, %p128
      %p130 = scmp.ne.s32.totalorder %s119, %s120
      %p131 = scmp.eq.s32.totalorder %s22, 0
      %p132 = por %p130, %p131
      %p133 = scmp.ne.s32.totalorder %s119, %s120
      %p134 = scmp.eq.s32.totalorder %s23, 1
      %p135 = por %p133, %p134
      %p137 = scmp.ne.s32.totalorder %s120, %s136
      %p138 = scmp.eq.s32.totalorder %s23, 0
      %p139 = por %p137, %p138
      %p140 = scmp.le.s32.totalorder 1, %s17
      %p141 = scmp.lt.s32.totalorder %s17, 3
      %p142 = pnand %p140, %p141
      %p143 = pneg %p142
      // Predicated region
      $region9: #{tpu_custom_call.1} parent=5 // pred_check
        _
      $region10: #{tpu_custom_call.1} parent=5 // pred_check_branch
        %145 = sbr.rel (%p142) target = $region12
      $region11: #{tpu_custom_call.1} parent=5 // pred_region
        %s146 = ssub.s32 %s17, 1
        // Predicated region
        $region13: #{tpu_custom_call.1} parent=11 // pred_check
          %p147 = pneg %p64
        $region14: #{tpu_custom_call.1} parent=11 // pred_check_branch
          %149 = sbr.rel (%p147) target = $region16
        $region15: #{tpu_custom_call.1} parent=11 // pred_region
          _
        $region16: #{tpu_custom_call.1} parent=11 // pred_fallthru
          _
        // Predicated region
        $region17: #{tpu_custom_call.1} parent=11 // pred_check
          %p150 = pneg %p85
        $region18: #{tpu_custom_call.1} parent=11 // pred_check_branch
          %152 = sbr.rel (%p150) target = $region20
        $region19: #{tpu_custom_call.1} parent=11 // pred_region
          _
        $region20: #{tpu_custom_call.1} parent=11 // pred_fallthru
          _
        // Predicated region
        $region21: #{tpu_custom_call.1} parent=11 // pred_check
          %p153 = pneg %p106
        $region22: #{tpu_custom_call.1} parent=11 // pred_check_branch
          %155 = sbr.rel (%p153) target = $region24
        $region23: #{tpu_custom_call.1} parent=11 // pred_region
          %157 = vsyncadd [#allocation6], 0
          %s158 = sshll.u32 %s3, 4
          %s159 = int_to_ptr.hbm [resolvable:$true] %s158
          %s160 = sshll.u32 [#allocation5], 4
          %s161 = int_to_ptr.vmem [resolvable:$true] %s160
          %166 = dma.hbm_to_vmem [thread:$0]  %s159, 512, %s161, [#allocation6], 128, 128, 8
        $region24: #{tpu_custom_call.1} parent=11 // pred_fallthru
          _
      $region12: #{tpu_custom_call.1} parent=5 // pred_fallthru
        _
      %p167 = scmp.lt.s32.totalorder %s17, 2
      // Predicated region
      $region25: #{tpu_custom_call.1} parent=5 // pred_check
        %p168 = pneg %p167
      $region26: #{tpu_custom_call.1} parent=5 // pred_check_branch
        %170 = sbr.rel (%p168) target = $region28
      $region27: #{tpu_custom_call.1} parent=5 // pred_region
        // Predicated region
        $region29: #{tpu_custom_call.1} parent=27 // pred_check
          %p171 = pneg %p37
        $region30: #{tpu_custom_call.1} parent=27 // pred_check_branch
          %173 = sbr.rel (%p171) target = $region32
        $region31: #{tpu_custom_call.1} parent=27 // pred_region
          %s174 = sand.u32 %s27, 1
          %s175 = scalar_lea.sflag [#allocation3], %s174
          %s176 = sand.u32 %s27, 1
          %s177 = smul.addr %s176, 64
          %s178 = scalar_lea.vmem [#allocation2], %s177
          %180 = vsyncadd %s175, 0
          %s181 = smul.addr %s17, 8
          %s182 = smul.addr %s181, 8
          %s183 = scalar_lea.hbm %s0, %s182
          %s184 = sshll.u32 %s183, 4
          %s185 = int_to_ptr.hbm [resolvable:$true] %s184
          %s186 = sshll.u32 %s178, 4
          %s187 = int_to_ptr.vmem [resolvable:$true] %s186
          %192 = dma.hbm_to_vmem [thread:$0]  %s185, 1024, %s187, %s175, 256, 256, 16
        $region32: #{tpu_custom_call.1} parent=27 // pred_fallthru
          _
      $region28: #{tpu_custom_call.1} parent=5 // pred_fallthru
        _
      %p193 = scmp.le.s32.totalorder 1, %s17
      %p194 = scmp.lt.s32.totalorder %s17, 3
      %p195 = pnand %p193, %p194
      %p196 = pneg %p195
      // Predicated region
      $region33: #{tpu_custom_call.1} parent=5 // pred_check
        _
      $region34: #{tpu_custom_call.1} parent=5 // pred_check_branch
        %198 = sbr.rel (%p195) target = $region36
      $region35: #{tpu_custom_call.1} parent=5 // pred_region
        %s199 = ssub.s32 %s17, 1
        %s200 = sand.u32 %s30, 1
        %s201 = scalar_lea.sflag [#allocation3], %s200
        %s202 = sand.u32 %s30, 1
        %s203 = smul.addr %s202, 64
        %s204 = scalar_lea.vmem [#allocation2], %s203
        // Predicated region
        $region37: #{tpu_custom_call.1} parent=35 // pred_check
          %p205 = pneg %p43
        $region38: #{tpu_custom_call.1} parent=35 // pred_check_branch
          %207 = sbr.rel (%p205) target = $region40
        $region39: #{tpu_custom_call.1} parent=35 // pred_region
          %209 = dma.done %s201, 1024
        $region40: #{tpu_custom_call.1} parent=35 // pred_fallthru
          _
        // Predicated region
        $region41: #{tpu_custom_call.1} parent=35 // pred_check
          %p210 = pneg %p106
        $region42: #{tpu_custom_call.1} parent=35 // pred_check_branch
          %212 = sbr.rel (%p210) target = $region44
        $region43: #{tpu_custom_call.1} parent=35 // pred_region
          %214 = dma.done [#allocation6], 512
        $region44: #{tpu_custom_call.1} parent=35 // pred_fallthru
          _
        %s215 = sand.u32 %s30, 1
        %s216 = scalar_lea.sflag [#allocation3], %s215
        %s217 = sand.u32 %s30, 1
        %s218 = smul.addr %s217, 64
        %s219 = scalar_lea.vmem [#allocation2], %s218
        %p220 = pneg %p43
        %p221 = pneg %p40
        %p222 = pneg %p64
        %p223 = pneg %p61
        %p224 = pneg %p85
        %p225 = pneg %p82
        %p226 = pneg %p106
        %p227 = pneg %p103
        %p228 = pneg %p132
        %p229 = pneg %p129
        %s230 = sand.u32 %s119, 1
        %s231 = scalar_lea.sflag [#allocation4], %s230
        %s232 = sand.u32 %s119, 1
        %s233 = smul.addr %s232, 64
        %s234 = scalar_lea.vmem [#allocation7], %s233
        %v235 = vld [vmem:[%s204] sm:$0xff]
        %v236 = vld [vmem:[%s204 + $0x8] sm:$0xff]
        %v237 = vld [vmem:[%s204 + $0x10] sm:$0xff]
        %v238 = vld [vmem:[%s204 + $0x18] sm:$0xff]
        %v239 = vld [vmem:[%s204 + $0x20] sm:$0xff]
        %v240 = vld [vmem:[%s204 + $0x28] sm:$0xff]
        %v241 = vld [vmem:[%s204 + $0x30] sm:$0xff]
        %v242 = vld [vmem:[%s204 + $0x38] sm:$0xff]
        %v243 = vld [vmem:[%s1] sm:$0xff]
        %v244 = vld [vmem:[%s1 + $0x8] sm:$0xff]
        %v245 = vld [vmem:[%s1 + $0x10] sm:$0xff]
        %v246 = vld [vmem:[%s1 + $0x18] sm:$0xff]
        %248 = vset.pattern.permute.xlu0 0
        %249 = vperm.xlu0 %248, %v243
        %v250 = vpop.permute.xlu0 %249
        %253 = vset.pattern.permute.xlu0 0
        %254 = vperm.xlu0 %253, %v244
        %v255 = vpop.permute.xlu0 %254
        %258 = vset.pattern.permute.xlu0 0
        %259 = vperm.xlu0 %258, %v245
        %v260 = vpop.permute.xlu0 %259
        %263 = vset.pattern.permute.xlu0 0
        %264 = vperm.xlu0 %263, %v246
        %v265 = vpop.permute.xlu0 %264
        %v267 = vmul.f32 %v235, %v250
        %v268 = vmul.f32 %v236, %v250
        %v269 = vmul.f32 %v237, %v255
        %v270 = vmul.f32 %v238, %v255
        %v271 = vmul.f32 %v239, %v260
        %v272 = vmul.f32 %v240, %v260
        %v273 = vmul.f32 %v241, %v265
        %v274 = vmul.f32 %v242, %v265
        %v275 = vadd.f32 %v267, %v269
        %v276 = vadd.f32 %v275, %v271
        %v277 = vadd.f32 %v276, %v273
        %v278 = vrot.slane %v277, 4
        %v279 = vadd.f32 %v277, %v278
        %v280 = vrot.slane %v279, 2
        %v281 = vadd.f32 %v279, %v280
        %v282 = vrot.slane %v281, 1
        %v283 = vadd.f32 %v281, %v282
        %v284 = vadd.f32 %v268, %v270
        %v285 = vadd.f32 %v284, %v272
        %v286 = vadd.f32 %v285, %v274
        %v287 = vrot.slane %v286, 4
        %v288 = vadd.f32 %v286, %v287
        %v289 = vrot.slane %v288, 2
        %v290 = vadd.f32 %v288, %v289
        %v291 = vrot.slane %v290, 1
        %v292 = vadd.f32 %v290, %v291
        %v293 = vmax.f32 %v283, %v292
        %294 = vmax.xlane.f32.xlu0 %v293
        %v295 = vpop.xlane.xlu0 %294
        %v296 = vsub.f32 %v283, %v295
        %v297 = vsub.f32 %v292, %v295
        %v298 = vmul.f32 %v296, 1.442695
        %v299 = vpow.pop %v298
        %v300 = vmul.f32 %v297, 1.442695
        %v301 = vpow.pop %v300
        %v302 = vadd.f32 %v299, %v301
        %303 = vadd.xlane.f32.xlu0 %v302
        %v304 = vpop.xlane.xlu0 %303
        %v305 = vmul.f32 %v235, %v299
        %v306 = vmul.f32 %v236, %v301
        %v307 = vmul.f32 %v237, %v299
        %v308 = vmul.f32 %v238, %v301
        %v309 = vmul.f32 %v239, %v299
        %v310 = vmul.f32 %v240, %v301
        %v311 = vmul.f32 %v241, %v299
        %v312 = vmul.f32 %v242, %v301
        %v313 = vadd.f32 %v305, %v306
        %314 = vadd.xlane.f32.xlu0 %v313
        %v315 = vpop.xlane.xlu0 %314
        %v316 = vadd.f32 %v307, %v308
        %317 = vadd.xlane.f32.xlu0 %v316
        %v318 = vpop.xlane.xlu0 %317
        %v319 = vadd.f32 %v309, %v310
        %320 = vadd.xlane.f32.xlu0 %v319
        %v321 = vpop.xlane.xlu0 %320
        %v322 = vadd.f32 %v311, %v312
        %323 = vadd.xlane.f32.xlu0 %v322
        %v324 = vpop.xlane.xlu0 %323
        %v325 = vrcp.pop %v304
        %v326 = vmul.f32 %v304, %v325
        %v327 = vsub.f32 1.0, %v326
        %v328 = vmul.f32 %v325, %v327
        %v329 = vadd.f32 %v325, %v328
        %vm330 = vweird.f32 %v304
        %vm331 = vweird.f32 %v325
        %vm332 = vmor %vm330, %vm331
        %v333 = vsel %vm332, %v325, %v329
        %v334 = vand.u32 2147483647, %v304
        %vm335 = vcmp.eq.f32.partialorder %v334, 8.507059e+37
        %v336 = vand.u32 %v304, 2147483648
        %v337 = vor.u32 1.1754944e-38, %v336
        %v338 = vsel %vm335, %v337, %v333
        %v339 = vmul.f32 %v315, %v338
        %v340 = vmul.f32 %v318, %v338
        %v341 = vmul.f32 %v321, %v338
        %v342 = vmul.f32 %v324, %v338
        %v343 = vld [vmem:[%s2] sm:$0xff]
        %v344 = vld [vmem:[%s2 + $0x8] sm:$0xff]
        %v345 = vld [vmem:[%s2 + $0x10] sm:$0xff]
        %v346 = vld [vmem:[%s2 + $0x18] sm:$0xff]
        %vm347 = vcmask 261120
        %v349 = vsel %vm347, %v343, 0
        %v352 = vsel %vm347, %v344, 0
        %v355 = vsel %vm347, %v345, 0
        %v358 = vsel %vm347, %v346, 0
        %360 = vmatpush.msra.mxu0 0.0
        %361 = vmatpush.msra.mxu0 0.0
        %362 = vmatpush.msra.mxu0 0.0
        %363 = vmatpush.msra.mxu0 0.0
        %364 = vmatpush.msra.mxu0 0.0
        %365 = vmatpush.msra.mxu0 0.0
        %366 = vmatpush.msra.mxu0 0.0
        %367 = vmatpush.msra.mxu0 0.0
        %368 = vmatpush.msra.mxu0 0.0
        %369 = vmatpush.msra.mxu0 0.0
        %370 = vmatpush.msra.mxu0 0.0
        %371 = vmatpush.msra.mxu0 0.0
        %372 = vmatpush.msra.mxu0 %v342
        %373 = vmatpush.msra.mxu0 %v341
        %374 = vmatpush.msra.mxu0 %v340
        %375 = vmatpush.msra.mxu0 %v339
        %376 = vmatmul.f32.gmra.mxu0 %v349
        %v377 = vpop.f32.mrf.mxu0
        %v378 = vadd.f32 0.0, %v377
        %379 = vmatmul.f32.gmra.mxu0 %v352
        %v380 = vpop.f32.mrf.mxu0
        %v381 = vadd.f32 0.0, %v380
        %382 = vmatmul.f32.gmra.mxu0 %v355
        %v383 = vpop.f32.mrf.mxu0
        %v384 = vadd.f32 0.0, %v383
        %385 = vmatmul.f32.gmra.mxu0 %v358
        %v386 = vpop.f32.mrf.mxu0
        %v387 = vadd.f32 0.0, %v386
        %388 = vdwg.mxu0
        %vm389 = vcmp.ge.f32.partialorder %v378, 0.0
        %vm390 = vcmp.ge.f32.partialorder %v381, 0.0
        %vm391 = vcmp.ge.f32.partialorder %v384, 0.0
        %vm392 = vcmp.ge.f32.partialorder %v387, 0.0
        %v393 = vmul.f32 %v378, 0.2
        %v394 = vmul.f32 %v381, 0.2
        %v395 = vmul.f32 %v384, 0.2
        %v396 = vmul.f32 %v387, 0.2
        %v397 = vsel %vm389, %v378, %v393
        %v398 = vsel %vm390, %v381, %v394
        %v399 = vsel %vm391, %v384, %v395
        %v400 = vsel %vm392, %v387, %v396
        %v401 = vld [vmem:[#allocation5] sm:$0xff]
        %v402 = vld [vmem:[#allocation5 + $0x8] sm:$0xff]
        %v403 = vld [vmem:[#allocation5 + $0x10] sm:$0xff]
        %v404 = vld [vmem:[#allocation5 + $0x18] sm:$0xff]
        %v406 = vsel %vm347, %v401, 0
        %v409 = vsel %vm347, %v402, 0
        %v412 = vsel %vm347, %v403, 0
        %v415 = vsel %vm347, %v404, 0
        %417 = vmatpush.msra.mxu0 0.0
        %418 = vmatpush.msra.mxu0 0.0
        %419 = vmatpush.msra.mxu0 0.0
        %420 = vmatpush.msra.mxu0 0.0
        %421 = vmatpush.msra.mxu0 0.0
        %422 = vmatpush.msra.mxu0 0.0
        %423 = vmatpush.msra.mxu0 0.0
        %424 = vmatpush.msra.mxu0 0.0
        %425 = vmatpush.msra.mxu0 0.0
        %426 = vmatpush.msra.mxu0 0.0
        %427 = vmatpush.msra.mxu0 0.0
        %428 = vmatpush.msra.mxu0 0.0
        %429 = vmatpush.msra.mxu0 %v400
        %430 = vmatpush.msra.mxu0 %v399
        %431 = vmatpush.msra.mxu0 %v398
        %432 = vmatpush.msra.mxu0 %v397
        %433 = vmatmul.f32.gmra.mxu0 %v406
        %v434 = vpop.f32.mrf.mxu0
        %v435 = vadd.f32 0.0, %v434
        %436 = vmatmul.f32.gmra.mxu0 %v409
        %v437 = vpop.f32.mrf.mxu0
        %v438 = vadd.f32 0.0, %v437
        %439 = vmatmul.f32.gmra.mxu0 %v412
        %v440 = vpop.f32.mrf.mxu0
        %v441 = vadd.f32 0.0, %v440
        %442 = vmatmul.f32.gmra.mxu0 %v415
        %v443 = vpop.f32.mrf.mxu0
        %v444 = vadd.f32 0.0, %v443
        %445 = vdwg.mxu0
        %447 = vset.pattern.permute.xlu0 0
        %448 = vperm.xlu0 %447, %v435
        %v449 = vpop.permute.xlu0 %448
        %452 = vset.pattern.permute.xlu0 0
        %453 = vperm.xlu0 %452, %v438
        %v454 = vpop.permute.xlu0 %453
        %457 = vset.pattern.permute.xlu0 0
        %458 = vperm.xlu0 %457, %v441
        %v459 = vpop.permute.xlu0 %458
        %462 = vset.pattern.permute.xlu0 0
        %463 = vperm.xlu0 %462, %v444
        %v464 = vpop.permute.xlu0 %463
        %v466 = vadd.f32 %v235, %v449
        %v467 = vadd.f32 %v236, %v449
        %v468 = vadd.f32 %v237, %v454
        %v469 = vadd.f32 %v238, %v454
        %v470 = vadd.f32 %v239, %v459
        %v471 = vadd.f32 %v240, %v459
        %v472 = vadd.f32 %v241, %v464
        %v473 = vadd.f32 %v242, %v464
        %474 = vst [vmem:[%s234] sm:$0xff] %v466
        %475 = vst [vmem:[%s234 + $0x8] sm:$0xff] %v467
        %476 = vst [vmem:[%s234 + $0x10] sm:$0xff] %v468
        %477 = vst [vmem:[%s234 + $0x18] sm:$0xff] %v469
        %478 = vst [vmem:[%s234 + $0x20] sm:$0xff] %v470
        %479 = vst [vmem:[%s234 + $0x28] sm:$0xff] %v471
        %480 = vst [vmem:[%s234 + $0x30] sm:$0xff] %v472
        %481 = vst [vmem:[%s234 + $0x38] sm:$0xff] %v473
        %s482 = sand.u32 %s119, 1
        %s483 = scalar_lea.sflag [#allocation4], %s482
        %s484 = sand.u32 %s119, 1
        %s485 = smul.addr %s484, 64
        %s486 = scalar_lea.vmem [#allocation7], %s485
        // Predicated region
        $region45: #{tpu_custom_call.1} parent=35 // pred_check
          %p487 = pneg %p129
        $region46: #{tpu_custom_call.1} parent=35 // pred_check_branch
          %489 = sbr.rel (%p487) target = $region48
        $region47: #{tpu_custom_call.1} parent=35 // pred_region
          %491 = vsyncadd %s483, 0
          %s492 = smul.addr %s22, 8
          %s493 = smul.addr %s492, 8
          %s494 = scalar_lea.hbm %s4, %s493
          %s495 = sshll.u32 %s486, 4
          %s496 = int_to_ptr.vmem [resolvable:$true] %s495
          %s497 = sshll.u32 %s494, 4
          %s498 = int_to_ptr.hbm [resolvable:$true] %s497
          %503 = dma.vmem_to_hbm [thread:$0]  %s496, 1024, %s498, %s483, 256, 256, 16
        $region48: #{tpu_custom_call.1} parent=35 // pred_fallthru
          _
      $region36: #{tpu_custom_call.1} parent=5 // pred_fallthru
        _
      %p504 = scmp.le.s32.totalorder 2, %s17
      // Predicated region
      $region49: #{tpu_custom_call.1} parent=5 // pred_check
        %p505 = pneg %p504
      $region50: #{tpu_custom_call.1} parent=5 // pred_check_branch
        %507 = sbr.rel (%p505) target = $region52
      $region51: #{tpu_custom_call.1} parent=5 // pred_region
        %s508 = ssub.s32 %s17, 2
        // Predicated region
        $region53: #{tpu_custom_call.1} parent=51 // pred_check
          %p509 = pneg %p135
        $region54: #{tpu_custom_call.1} parent=51 // pred_check_branch
          %511 = sbr.rel (%p509) target = $region56
        $region55: #{tpu_custom_call.1} parent=51 // pred_region
          %s512 = sand.u32 %s120, 1
          %s513 = scalar_lea.sflag [#allocation4], %s512
          %s514 = sand.u32 %s120, 1
          %s515 = smul.addr %s514, 64
          %s516 = scalar_lea.vmem [#allocation7], %s515
          %518 = dma.done %s513, 1024
        $region56: #{tpu_custom_call.1} parent=51 // pred_fallthru
          _
      $region52: #{tpu_custom_call.1} parent=5 // pred_fallthru
        _
    $region6: #{tpu_custom_call.1} parent=1 // loop_footer
      %s21 = sadd.s32 1, %s17
    $region7: #{tpu_custom_call.1} parent=1 // loop_footer_branch
      %16 = sbr.rel target = $region3
    $region8: #{tpu_custom_call.1} parent=1 // loop_exit
      _
    %519 = vsyncpa [#allocation3], 1
    %s520 = scalar_lea.sflag [#allocation3], 1
    %521 = vsyncpa %s520, 1
    %522 = vsyncpa [#allocation6], 1
    %523 = vsyncpa [#allocation4], 1
    %s524 = scalar_lea.sflag [#allocation4], 1
    %525 = vsyncpa %s524, 1

</llo_original>
